<compile_context>
chip_gen: v7x
topology: tpu7x:2x2x1
jax: 0.10.0
libtpu: 0.0.40
codegen_flags: <defaults>
</compile_context>

<pallas_src>
import jax
import jax.numpy as jnp
from jax import lax
from jax.experimental import pallas as pl
from jax.experimental.pallas import tpu as pltpu


def _round_up(x, m):
    return ((x + m - 1) // m) * m


# ---------------------------------------------------------------------------
# Fast path: segment-mean via one-hot / membership matmuls on the MXU.
# ---------------------------------------------------------------------------
def _embedding_bag_mm_kernel(off_ref, starts_ref, ends_ref, inv_ref, ids_ref,
                             w_ref, out_ref, acc_ref):
    """Grid = (bag_blocks, id_chunks); id_chunks is the reduction axis.

    off_ref:    [padded_bags + 1]      int32 SMEM (scalar prefetch, skip guard)
    starts_ref: [1, tb, 1]             int32 VMEM  bag start offsets
    ends_ref:   [1, tb, 1]             int32 VMEM  bag end offsets
    inv_ref:    [1, tb, 1]             f32   VMEM  1 / max(count, 1)
    ids_ref:    [1, tc, 1]             int32 VMEM  feature ids of this chunk
    w_ref:      [nf_pad, dim_pad]      VMEM  embedding table (resident)
    out_ref:    [tb, dim_pad]          VMEM  output block (written at last chunk)
    acc_ref:    [tb, nf_pad]           f32   VMEM  per-bag feature counts
    """
    i = pl.program_id(0)
    k = pl.program_id(1)
    n_chunks = pl.num_programs(1)
    tb = out_ref.shape[0]
    tc = ids_ref.shape[1]
    nf = acc_ref.shape[1]

    @pl.when(k == 0)
    def _():
        acc_ref[...] = jnp.zeros_like(acc_ref)

    # Skip chunks that cannot intersect this bag block's id range.
    base = i * tb
    blk_lo = off_ref[base]
    blk_hi = off_ref[base + tb]
    chunk_lo = k * tc
    intersects = jnp.logical_and(blk_hi > chunk_lo, blk_lo < chunk_lo + tc)

    @pl.when(intersects)
    def _():
        ids = ids_ref[0]          # (tc, 1) int32, already on sublanes
        starts = starts_ref[0]    # (tb, 1) int32
        ends = ends_ref[0]        # (tb, 1) int32

        # Membership P[r, j] = 1 iff global id-position (chunk_lo + j) lies in
        # bag r of this block.  0/1 values are exact in bf16.
        j_glob = lax.broadcasted_iota(jnp.int32, (tb, tc), 1) + chunk_lo
        p = jnp.logical_and(j_glob >= starts, j_glob < ends).astype(jnp.bfloat16)

        # One-hot E[j, f] = 1 iff ids[j] == f (padded ids are masked out by P).
        f_iota = lax.broadcasted_iota(jnp.int32, (tc, nf), 1)
        e = (f_iota == ids).astype(jnp.bfloat16)

        # Per-bag feature multiplicities (exact integers in the f32 scratch).
        acc_ref[...] += jnp.dot(p, e, preferred_element_type=jnp.float32)

    @pl.when(k == n_chunks - 1)
    def _():
        # sum_{j in bag} weight[data[j]]  ==  counts @ weight.
        sums = jnp.dot(acc_ref[...], w_ref[...].astype(jnp.float32),
                       preferred_element_type=jnp.float32)       # (tb, dim_pad)
        out_ref[...] = (sums * inv_ref[0]).astype(out_ref.dtype)  # mean (empty->0)


def _forward_matmul(data, offsets, weight, num_bags, n_ids):
    num_features, dim = weight.shape
    out_dtype = weight.dtype
    nf_pad = _round_up(num_features, 128)
    dim_pad = _round_up(dim, 128)

    # Bag tile: >= 8 (sublane aligned), grow with bag count to amortize the
    # ~0.35us per-grid-step overhead, cap at 128 (MXU row dim / scratch size).
    tb = 8
    while tb < 128 and num_bags > 4 * tb:
        tb *= 2
    # Id-chunk tile: lane-aligned (128), grow while the one-hot intermediate
    # (tc, nf_pad) stays small.
    tc = 128
    while tc < 512 and n_ids > 2 * tc and tc * nf_pad * 2 < (2 << 20):
        tc *= 2

    num_blocks = pl.cdiv(num_bags, tb)
    padded_bags = num_blocks * tb
    num_chunks = pl.cdiv(n_ids, tc)
    padded_ids = num_chunks * tc

    # Pad the embedding table to (8,128)-aligned tiles; padded rows are zero
    # and padded feature columns of the one-hot never match a real id.
    w = weight
    if nf_pad != num_features or dim_pad != dim:
        w = jnp.zeros((nf_pad, dim_pad), weight.dtype)
        w = w.at[:num_features, :dim].set(weight)

    # Pad offsets; padded bags are empty (start == end == n_ids).
    off_pad = jnp.concatenate(
        [offsets, jnp.broadcast_to(offsets[-1:], (padded_bags - num_bags,))])
    starts = off_pad[:-1]
    ends = off_pad[1:]
    inv = 1.0 / jnp.maximum(ends - starts, 1).astype(jnp.float32)
    starts3 = starts.reshape(num_blocks, tb, 1)
    ends3 = ends.reshape(num_blocks, tb, 1)
    inv3 = inv.reshape(num_blocks, tb, 1)

    if padded_ids > n_ids:
        data = jnp.concatenate(
            [data, jnp.zeros((padded_ids - n_ids,), jnp.int32)])
    ids3 = data.reshape(num_chunks, tc, 1)

    out = pl.pallas_call(
        _embedding_bag_mm_kernel,
        out_shape=jax.ShapeDtypeStruct((padded_bags, dim_pad), out_dtype),
        grid_spec=pltpu.PrefetchScalarGridSpec(
            num_scalar_prefetch=1,          # padded offsets -> SMEM (skip guard)
            grid=(num_blocks, num_chunks),
            in_specs=[
                pl.BlockSpec((1, tb, 1), lambda i, k, off: (i, 0, 0)),   # starts
                pl.BlockSpec((1, tb, 1), lambda i, k, off: (i, 0, 0)),   # ends
                pl.BlockSpec((1, tb, 1), lambda i, k, off: (i, 0, 0)),   # 1/count
                pl.BlockSpec((1, tc, 1), lambda i, k, off: (k, 0, 0)),   # ids chunk
                # Whole embedding table resident in VMEM (constant index_map).
                pl.BlockSpec((nf_pad, dim_pad), lambda i, k, off: (0, 0)),
            ],
            out_specs=pl.BlockSpec((tb, dim_pad), lambda i, k, off: (i, 0)),
            scratch_shapes=[pltpu.VMEM((tb, nf_pad), jnp.float32)],
        ),
        compiler_params=pltpu.CompilerParams(
            dimension_semantics=("parallel", "arbitrary"),
        ),
    )(off_pad, starts3, ends3, inv3, ids3, w)

    return out[:num_bags, :dim]


# ---------------------------------------------------------------------------
# Fallback path for very large vocabularies: serial per-row gather.
# ---------------------------------------------------------------------------
def _embedding_bag_gather_kernel(idx_ref, off_ref, weight_ref, out_ref):
    blk = pl.program_id(0)
    tb, dim = out_ref.shape
    base = blk * tb

    for r in range(tb):  # static unroll -> static output store indices
        start = off_ref[base + r]
        end = off_ref[base + r + 1]

        def body(j, acc):
            row = weight_ref[pl.ds(idx_ref[j], 1), :]   # dynamic (1, dim) gather
            return acc + row.astype(jnp.float32)

        acc = lax.fori_loop(start, end, body, jnp.zeros((1, dim), jnp.float32))
        denom = jnp.maximum(end - start, 1).astype(jnp.float32)
        out_ref[pl.ds(r, 1), :] = (acc / denom).astype(out_ref.dtype)


def _forward_gather(data, offsets, weight, num_bags, n_ids):
    num_features, dim = weight.shape
    tb = 8
    while tb < 64 and num_bags > 8 * tb:
        tb *= 2
    num_blocks = pl.cdiv(num_bags, tb)
    padded_bags = num_blocks * tb
    if padded_bags > num_bags:
        pad = jnp.broadcast_to(offsets[-1:], (padded_bags - num_bags,))
        offsets = jnp.concatenate([offsets, pad])

    out = pl.pallas_call(
        _embedding_bag_gather_kernel,
        out_shape=jax.ShapeDtypeStruct((padded_bags, dim), weight.dtype),
        grid_spec=pltpu.PrefetchScalarGridSpec(
            num_scalar_prefetch=2,  # data, offsets -> SMEM
            grid=(num_blocks,),
            in_specs=[
                # TODO(synk): for vocabularies that do not fit VMEM, keep the
                # table in HBM (memory_space=pl.ANY) and gather rows via
                # manual async-copy DMA instead of a resident VMEM table.
                pl.BlockSpec((num_features, dim), lambda i, idx, off: (0, 0)),
            ],
            out_specs=pl.BlockSpec((tb, dim), lambda i, idx, off: (i, 0)),
        ),
        compiler_params=pltpu.CompilerParams(
            dimension_semantics=("parallel",),
        ),
    )(data, offsets, weight)
    return out[:num_bags]


# ---------------------------------------------------------------------------
# Public wrapper == FeaturizedEmbedding.get(TensorList(offsets, data)).
# ---------------------------------------------------------------------------
def featurized_embedding_forward(data, offsets, weight, max_norm=None,
                                 force_path=None):
    """data: 1-D ids; offsets: 1-D (num_bags+1); weight: (num_features, dim)."""
    num_features, dim = weight.shape
    num_bags = int(offsets.shape[0]) - 1

    if num_bags <= 0:
        # FeaturizedEmbedding.get: empty input -> empty (0, dim) output.
        return jnp.zeros((0, dim), dtype=weight.dtype)

    if max_norm is not None:
        # embedding_bag(max_norm=...) renormalizes looked-up rows to <= max_norm;
        # pre-scaling the table gives identical forward values.
        norms = jnp.sqrt(jnp.sum(jnp.square(weight.astype(jnp.float32)),
                                 axis=1, keepdims=True))
        scale = jnp.minimum(1.0, max_norm / jnp.maximum(norms, 1e-30))
        weight = (weight.astype(jnp.float32) * scale).astype(weight.dtype)

    data = data.astype(jnp.int32)
    offsets = offsets.astype(jnp.int32)
    n_ids = int(data.shape[0])
    if n_ids == 0:
        # Every bag is empty -> all-zero output (mean-mode semantics).
        return jnp.zeros((num_bags, dim), dtype=weight.dtype)

    nf_pad = _round_up(num_features, 128)
    use_mm = nf_pad <= 4096          # one-hot intermediates must fit VMEM
    if force_path == "matmul":
        use_mm = True
    elif force_path == "gather":
        use_mm = False

    if use_mm:
        return _forward_matmul(data, offsets, weight, num_bags, n_ids)
    return _forward_gather(data, offsets, weight, num_bags, n_ids)


if __name__ == "__main__":
    key = jax.random.PRNGKey(0)
    k_w, k_d = jax.random.split(key)

    num_features = 64   # feature-id vocabulary
    dim = 32            # embedding dimension
    weight = jax.random.normal(k_w, (num_features, dim), dtype=jnp.float32)

    # Ragged "TensorList": 10 bags with varying numbers of feature ids
    # (including one empty bag).
    lengths = [3, 1, 4, 2, 0, 5, 2, 3, 1, 4]
    total = sum(lengths)
    data = jax.random.randint(k_d, (total,), 0, num_features, dtype=jnp.int32)
    offs = [0]
    for L in lengths:
        offs.append(offs[-1] + L)
    offsets = jnp.asarray(offs, dtype=jnp.int32)

    def ref_forward(w):
        rows = []
        for b in range(len(lengths)):
            s, e = offs[b], offs[b + 1]
            if e > s:
                rows.append(jnp.mean(w[data[s:e]], axis=0))
            else:
                rows.append(jnp.zeros((dim,), w.dtype))
        return jnp.stack(rows)

    ref = ref_forward(weight)

    # Default (MXU matmul) path.
    out = jax.block_until_ready(featurized_embedding_forward(data, offsets, weight))
    assert out.shape == (len(lengths), dim)
    assert out.dtype == weight.dtype
    assert jnp.allclose(out, ref, atol=1e-5, rtol=1e-5)

    # Fallback row-gather path (used for very large vocabularies).
    out_g = jax.block_until_ready(
        featurized_embedding_forward(data, offsets, weight, force_path="gather"))
    assert jnp.allclose(out_g, ref, atol=1e-5, rtol=1e-5)

    # max_norm branch (embedding_bag renormalization).
    max_norm = 1.0
    norms = jnp.linalg.norm(weight, axis=1, keepdims=True)
    w_scaled = weight * jnp.minimum(1.0, max_norm / jnp.maximum(norms, 1e-30))
    ref_mn = ref_forward(w_scaled)
    out_mn = jax.block_until_ready(
        featurized_embedding_forward(data, offsets, weight, max_norm=max_norm))
    assert jnp.allclose(out_mn, ref_mn, atol=1e-5, rtol=1e-5)

    # Degenerate case from the spec: zero bags -> (0, dim) output.
    empty_out = featurized_embedding_forward(
        jnp.zeros((0,), jnp.int32), jnp.zeros((1,), jnp.int32), weight)
    assert empty_out.shape == (0, dim)

    print("KERNEL_OK")
</pallas_src>

<mosaic_0001>
module attributes {stable_mosaic.version = 11 : i64} {
  func.func @_embedding_bag_mm_kernel(%arg0: i32, %arg1: i32, %arg2: memref<17xi32, #tpu.memory_space<smem>>, %arg3: memref<1x8x1xi32, #tpu.memory_space<vmem>>, %arg4: memref<1x8x1xi32, #tpu.memory_space<vmem>>, %arg5: memref<1x8x1xf32, #tpu.memory_space<vmem>>, %arg6: memref<1x128x1xi32, #tpu.memory_space<vmem>>, %arg7: memref<128x128xf32, #tpu.memory_space<vmem>>, %arg8: memref<8x128xf32, #tpu.memory_space<vmem>>, %arg9: memref<8x128xf32, #tpu.memory_space<vmem>>) attributes {dimension_semantics = [#tpu.dimension_semantics<parallel>, #tpu.dimension_semantics<arbitrary>], iteration_bounds = array<i64: 2, 1>, scalar_prefetch = 1 : i64, scratch_operands = 1 : i64, tpu.core_type = #tpu.core_type<tc>, window_params = [{transform_indices = @transform_0, window_bounds = array<i64: 1, 8, 1>}, {transform_indices = @transform_1, window_bounds = array<i64: 1, 8, 1>}, {transform_indices = @transform_2, window_bounds = array<i64: 1, 8, 1>}, {transform_indices = @transform_3, window_bounds = array<i64: 1, 128, 1>}, {pipeline_mode = #tpu.pipeline_mode<synchronous>, transform_indices = @transform_4, window_bounds = array<i64: 128, 128>}, {transform_indices = @transform_5, window_bounds = array<i64: 8, 128>}]} {
    %c0_i32 = arith.constant 0 : i32
    %0 = arith.cmpi eq, %arg1, %c0_i32 : i32
    %1 = arith.extui %0 : i1 to i32
    %c0_i32_0 = arith.constant 0 : i32
    %2 = arith.cmpi ne, %1, %c0_i32_0 : i32
    scf.if %2 {
      %cst = arith.constant 0.000000e+00 : f32
      %19 = vector.broadcast %cst : f32 to vector<8x128xf32>
      %c0 = arith.constant 0 : index
      %c0_6 = arith.constant 0 : index
      %20 = vector.load %arg9[%c0, %c0_6] : memref<8x128xf32, #tpu.memory_space<vmem>>, vector<8x128xf32>
      tpu.vector_store %arg9[%c0, %c0_6], %19 {strides = array<i32>} : memref<8x128xf32, #tpu.memory_space<vmem>>, vector<8x128xf32>,
    } else {
    }
    %c8_i32 = arith.constant 8 : i32
    %3 = arith.muli %arg0, %c8_i32 : i32
    %4 = arith.index_cast %3 : i32 to index
    %5 = memref.load %arg2[%4] : memref<17xi32, #tpu.memory_space<smem>>
    %c8_i32_1 = arith.constant 8 : i32
    %6 = arith.addi %3, %c8_i32_1 : i32
    %7 = arith.index_cast %6 : i32 to index
    %8 = memref.load %arg2[%7] : memref<17xi32, #tpu.memory_space<smem>>
    %c128_i32 = arith.constant 128 : i32
    %9 = arith.muli %arg1, %c128_i32 : i32
    %10 = arith.cmpi sgt, %8, %9 : i32
    %c128_i32_2 = arith.constant 128 : i32
    %11 = arith.addi %9, %c128_i32_2 : i32
    %12 = arith.cmpi slt, %5, %11 : i32
    %13 = arith.andi %10, %12 : i1
    %14 = arith.extui %13 : i1 to i32
    %c0_i32_3 = arith.constant 0 : i32
    %15 = arith.cmpi ne, %14, %c0_i32_3 : i32
    scf.if %15 {
      %c0 = arith.constant 0 : index
      %c0_6 = arith.constant 0 : index
      %c0_7 = arith.constant 0 : index
      %19 = vector.load %arg6[%c0, %c0_6, %c0_7] : memref<1x128x1xi32, #tpu.memory_space<vmem>>, vector<1x128x1xi32>
      %20 = vector.shape_cast %19 : vector<1x128x1xi32> to vector<128x1xi32>
      %c0_8 = arith.constant 0 : index
      %c0_9 = arith.constant 0 : index
      %c0_10 = arith.constant 0 : index
      %21 = vector.load %arg3[%c0_8, %c0_9, %c0_10] : memref<1x8x1xi32, #tpu.memory_space<vmem>>, vector<1x8x1xi32>
      %22 = vector.shape_cast %21 : vector<1x8x1xi32> to vector<8x1xi32>
      %c0_11 = arith.constant 0 : index
      %c0_12 = arith.constant 0 : index
      %c0_13 = arith.constant 0 : index
      %23 = vector.load %arg4[%c0_11, %c0_12, %c0_13] : memref<1x8x1xi32, #tpu.memory_space<vmem>>, vector<1x8x1xi32>
      %24 = vector.shape_cast %23 : vector<1x8x1xi32> to vector<8x1xi32>
      %25 = tpu.iota {dimensions = array<i32: 1>} : vector<8x128xi32>
      %26 = vector.broadcast %9 : i32 to vector<8x128xi32>
      %27 = arith.addi %25, %26 : vector<8x128xi32>
      %28 = vector.broadcast %22 : vector<8x1xi32> to vector<8x128xi32>
      %29 = arith.cmpi sge, %27, %28 : vector<8x128xi32>
      %30 = vector.broadcast %24 : vector<8x1xi32> to vector<8x128xi32>
      %31 = arith.cmpi slt, %27, %30 : vector<8x128xi32>
      %32 = arith.andi %29, %31 : vector<8x128xi1>
      %33 = arith.extui %32 : vector<8x128xi1> to vector<8x128xi32>
      %34 = arith.sitofp %33 : vector<8x128xi32> to vector<8x128xf32>
      %35 = arith.truncf %34 : vector<8x128xf32> to vector<8x128xbf16>
      %36 = tpu.iota {dimensions = array<i32: 1>} : vector<128x128xi32>
      %37 = vector.broadcast %20 : vector<128x1xi32> to vector<128x128xi32>
      %38 = arith.cmpi eq, %36, %37 : vector<128x128xi32>
      %39 = arith.extui %38 : vector<128x128xi1> to vector<128x128xi32>
      %40 = arith.sitofp %39 : vector<128x128xi32> to vector<128x128xf32>
      %41 = arith.truncf %40 : vector<128x128xf32> to vector<128x128xbf16>
      %c0_14 = arith.constant 0 : index
      %c0_15 = arith.constant 0 : index
      %42 = vector.load %arg9[%c0_14, %c0_15] : memref<8x128xf32, #tpu.memory_space<vmem>>, vector<8x128xf32>
      %cst = arith.constant dense<0.000000e+00> : vector<8x128xf32>
      %43 = tpu.matmul %35, %41, %cst {dimension_numbers = #tpu.dot_dimension_numbers<[1], [0], [0], [1], [0, 0, 1, 1], [], []>} : vector<8x128xbf16>, vector<128x128xbf16>, vector<8x128xf32> -> vector<8x128xf32>
      %44 = arith.addf %42, %43 : vector<8x128xf32>
      %c0_16 = arith.constant 0 : index
      %c0_17 = arith.constant 0 : index
      %45 = vector.load %arg9[%c0_16, %c0_17] : memref<8x128xf32, #tpu.memory_space<vmem>>, vector<8x128xf32>
      tpu.vector_store %arg9[%c0_16, %c0_17], %44 {strides = array<i32>} : memref<8x128xf32, #tpu.memory_space<vmem>>, vector<8x128xf32>,
    } else {
    }
    %c0_i32_4 = arith.constant 0 : i32
    %16 = arith.cmpi eq, %arg1, %c0_i32_4 : i32
    %17 = arith.extui %16 : i1 to i32
    %c0_i32_5 = arith.constant 0 : i32
    %18 = arith.cmpi ne, %17, %c0_i32_5 : i32
    scf.if %18 {
      %c0 = arith.constant 0 : index
      %c0_6 = arith.constant 0 : index
      %19 = vector.load %arg9[%c0, %c0_6] : memref<8x128xf32, #tpu.memory_space<vmem>>, vector<8x128xf32>
      %c0_7 = arith.constant 0 : index
      %c0_8 = arith.constant 0 : index
      %20 = vector.load %arg7[%c0_7, %c0_8] : memref<128x128xf32, #tpu.memory_space<vmem>>, vector<128x128xf32>
      %cst = arith.constant dense<0.000000e+00> : vector<8x128xf32>
      %21 = tpu.matmul %19, %20, %cst {dimension_numbers = #tpu.dot_dimension_numbers<[1], [0], [0], [1], [0, 0, 1, 1], [], []>} : vector<8x128xf32>, vector<128x128xf32>, vector<8x128xf32> -> vector<8x128xf32>
      %c0_9 = arith.constant 0 : index
      %c0_10 = arith.constant 0 : index
      %c0_11 = arith.constant 0 : index
      %22 = vector.load %arg5[%c0_9, %c0_10, %c0_11] : memref<1x8x1xf32, #tpu.memory_space<vmem>>, vector<1x8x1xf32>
      %23 = vector.shape_cast %22 : vector<1x8x1xf32> to vector<8x1xf32>
      %24 = vector.broadcast %23 : vector<8x1xf32> to vector<8x128xf32>
      %25 = arith.mulf %21, %24 : vector<8x128xf32>
      %c0_12 = arith.constant 0 : index
      %c0_13 = arith.constant 0 : index
      %26 = vector.load %arg8[%c0_12, %c0_13] : memref<8x128xf32, #tpu.memory_space<vmem>>, vector<8x128xf32>
      tpu.vector_store %arg8[%c0_12, %c0_13], %25 {strides = array<i32>} : memref<8x128xf32, #tpu.memory_space<vmem>>, vector<8x128xf32>,
    } else {
    }
    return
  }
  func.func @transform_0(%arg0: i32, %arg1: i32, %arg2: memref<17xi32, #tpu.memory_space<smem>>) -> (i32, i32, i32) {
    %c0_i32 = arith.constant 0 : i32
    %c0_i32_0 = arith.constant 0 : i32
    %c0_i32_1 = arith.constant 0 : i32
    return %arg0, %c0_i32, %c0_i32_0 : i32, i32, i32
  }
  func.func @transform_1(%arg0: i32, %arg1: i32, %arg2: memref<17xi32, #tpu.memory_space<smem>>) -> (i32, i32, i32) {
    %c0_i32 = arith.constant 0 : i32
    %c0_i32_0 = arith.constant 0 : i32
    %c0_i32_1 = arith.constant 0 : i32
    return %arg0, %c0_i32, %c0_i32_0 : i32, i32, i32
  }
  func.func @transform_2(%arg0: i32, %arg1: i32, %arg2: memref<17xi32, #tpu.memory_space<smem>>) -> (i32, i32, i32) {
    %c0_i32 = arith.constant 0 : i32
    %c0_i32_0 = arith.constant 0 : i32
    %c0_i32_1 = arith.constant 0 : i32
    return %arg0, %c0_i32, %c0_i32_0 : i32, i32, i32
  }
  func.func @transform_3(%arg0: i32, %arg1: i32, %arg2: memref<17xi32, #tpu.memory_space<smem>>) -> (i32, i32, i32) {
    %c0_i32 = arith.constant 0 : i32
    %c0_i32_0 = arith.constant 0 : i32
    %c0_i32_1 = arith.constant 0 : i32
    return %arg1, %c0_i32, %c0_i32_0 : i32, i32, i32
  }
  func.func @transform_4(%arg0: i32, %arg1: i32, %arg2: memref<17xi32, #tpu.memory_space<smem>>) -> (i32, i32) {
    %c0_i32 = arith.constant 0 : i32
    %c0_i32_0 = arith.constant 0 : i32
    %c0_i32_1 = arith.constant 0 : i32
    return %c0_i32, %c0_i32_0 : i32, i32
  }
  func.func @transform_5(%arg0: i32, %arg1: i32, %arg2: memref<17xi32, #tpu.memory_space<smem>>) -> (i32, i32) {
    %c0_i32 = arith.constant 0 : i32
    %c0_i32_0 = arith.constant 0 : i32
    return %arg0, %c0_i32 : i32, i32
  }
}

</mosaic_0001>

<llo_original>
// kernel: tpu_custom_call.1
$region0: #{tpu_custom_call.1}
  #allocation0 [shape = 'u32[]', space=smem, size = 0x4, offset = 0x4, fixed_abs, tag = 'smem constant byte address 0x4 - core index']
  #allocation1 [shape = 'u32[144,128]{1,0:T(1,128)}', space=vmem, size = 0x12000, scoped, tag = 'internal scratch']
  #allocation2 [shape = 'f32[8,128]{1,0:T(8,128)}', space=vmem, size = 0x1000, scoped, tag = 'scratch operand']
  #allocation3 [shape = 's32[1]{0}', space=sflag, size = 0x4, scoped, tag = 'scoped memory for tpu_custom_call.1']
  #allocation4 [shape = 'u8[512]{0}', space=smem, size = 0x200, scoped, tag = 'prefetched SMEM operand 0']
  %s0 = inlined_call_operand.vmem [shape: s32[17], index: 0, kind: input, shape index: {}]
  %s1 = inlined_call_operand.vmem [shape: s32[2,8,1], index: 1, kind: input, shape index: {}]
  %s2 = inlined_call_operand.vmem [shape: s32[2,8,1], index: 2, kind: input, shape index: {}]
  %s3 = inlined_call_operand.vmem [shape: f32[2,8,1], index: 3, kind: input, shape index: {}]
  %s4 = inlined_call_operand.vmem [shape: s32[1,128,1], index: 4, kind: input, shape index: {}]
  %s5 = inlined_call_operand.vmem [shape: f32[128,128], index: 5, kind: input, shape index: {}]
  %s6 = inlined_call_operand.hbm [shape: f32[16,128], index: 6, kind: output, shape index: {}]
  %s7 = sld [smem:[#allocation0]]
  $region65: #{tpu_custom_call.1} parent=0
    _
  %s9 = ssub.s32 1, %s7
  %s10 = scalar_select 0, %s9, %s7
  %s11 = sshll.u32 %s0, 4
  %s12 = int_to_ptr.vmem [resolvable:$true] %s11
  %14 = dma.vmem_to_smem %s12, 16, [#allocation4], [#allocation3]
  %15 = dma.done [#allocation3], 16
  %16 = sfence
  $region1: #{tpu_custom_call.1} parent=0
    #allocation5 [shape = 'u8[8192]{0}', space=vmem, size = 0x2000, scoped, tag = 'output window, operand 0']
    #allocation6 [shape = 's32[2]{0}', space=sflag, size = 0x8, scoped, tag = 'scoped memory for tpu_custom_call.1']
    %17 = vsyncpa [#allocation6], 0
    %s18 = scalar_lea.sflag [#allocation6], 1
    %19 = vsyncpa %s18, 0
    loop: start=0, step=1, limit=4
    $region2: #{tpu_custom_call.1} parent=1 // loop_pre_header
      _
    $region3: #{tpu_custom_call.1} parent=1 // loop_header
      %s21 = sphi 0, %s25
      %p22 = scmp.ge.s32.totalorder %s21, 4
      %s28 = sphi 0, %s40
      %s29 = sphi 0, %s36
      %s30 = sphi 0, %s28
      %s31 = sphi 0, %s29
      %s32 = sphi 0, %s30
      %s33 = sphi 0, %s31
      %s43 = sphi 0, %s45
      %s46 = sphi 0, %s43
      %s47 = sphi 0, %s46
      %s63 = sphi 0, %s47
      %s69 = sphi 0, %s71
      %s72 = sphi 0, %s69
      %s73 = sphi 0, %s72
      %s89 = sphi 0, %s73
      %s95 = sphi 0, %s97
      %s98 = sphi 0, %s95
      %s99 = sphi 0, %s98
      %s115 = sphi 0, %s99
      %s121 = sphi 0, %s123
      %s124 = sphi 0, %s121
      %s125 = sphi 0, %s124
      %s141 = sphi 0, %s125
      %s145 = sphi 0, %s145
      %s147 = sphi 0, %s145
      %s148 = sphi 0, %s147
      %s162 = sphi 0, %s148
      %s168 = sphi 0, %s170
      %s171 = sphi 0, %s168
      %s172 = sphi 0, %s171
      %s188 = sphi 0, %s172
    $region4: #{tpu_custom_call.1} parent=1 // loop_header_branch
      %24 = sbr.rel (%p22) target = $region8
    $region5: #{tpu_custom_call.1} parent=1 // loop_body
      %s26 = ssub.s32 %s21, 1
      %s27 = ssub.s32 %s21, 2
      %s34 = sadd.s32 1, %s29
      %p35 = scmp.ge.s32.totalorder %s34, 1
      %s36 = scalar_select %p35, 0, %s34
      %s37 = sadd.s32 1, %s28
      %s38 = scalar_select %p35, %s37, %s28
      %p39 = scmp.ge.s32.totalorder %s38, 2
      %s40 = scalar_select %p39, 0, %s38
      %s41 = ssub.s32 %s28, %s40
      %p42 = scmp.eq.s32.totalorder %s41, 0
      %s44 = sadd.s32 %s43, 1
      %s45 = scalar_select %p42, %s43, %s44
      %p48 = pneg %p42
      %p49 = scmp.eq.s32.totalorder %s21, 1
      %p50 = por %p48, %p49
      %p51 = scmp.ne.s32.totalorder %s43, %s46
      %p52 = scmp.eq.s32.totalorder %s21, 0
      %p53 = por %p51, %p52
      %p54 = scmp.ne.s32.totalorder %s43, %s46
      %p55 = scmp.eq.s32.totalorder %s26, 1
      %p56 = por %p54, %p55
      %p57 = scmp.ne.s32.totalorder %s46, %s47
      %p58 = scmp.eq.s32.totalorder %s26, 0
      %p59 = por %p57, %p58
      %p60 = scmp.ne.s32.totalorder %s46, %s47
      %p61 = scmp.eq.s32.totalorder %s27, 1
      %p62 = por %p60, %p61
      %p64 = scmp.ne.s32.totalorder %s47, %s63
      %p65 = scmp.eq.s32.totalorder %s27, 0
      %p66 = por %p64, %p65
      %s67 = ssub.s32 %s28, %s40
      %p68 = scmp.eq.s32.totalorder %s67, 0
      %s70 = sadd.s32 %s69, 1
      %s71 = scalar_select %p68, %s69, %s70
      %p74 = pneg %p68
      %p75 = scmp.eq.s32.totalorder %s21, 1
      %p76 = por %p74, %p75
      %p77 = scmp.ne.s32.totalorder %s69, %s72
      %p78 = scmp.eq.s32.totalorder %s21, 0
      %p79 = por %p77, %p78
      %p80 = scmp.ne.s32.totalorder %s69, %s72
      %p81 = scmp.eq.s32.totalorder %s26, 1
      %p82 = por %p80, %p81
      %p83 = scmp.ne.s32.totalorder %s72, %s73
      %p84 = scmp.eq.s32.totalorder %s26, 0
      %p85 = por %p83, %p84
      %p86 = scmp.ne.s32.totalorder %s72, %s73
      %p87 = scmp.eq.s32.totalorder %s27, 1
      %p88 = por %p86, %p87
      %p90 = scmp.ne.s32.totalorder %s73, %s89
      %p91 = scmp.eq.s32.totalorder %s27, 0
      %p92 = por %p90, %p91
      %s93 = ssub.s32 %s28, %s40
      %p94 = scmp.eq.s32.totalorder %s93, 0
      %s96 = sadd.s32 %s95, 1
      %s97 = scalar_select %p94, %s95, %s96
      %p100 = pneg %p94
      %p101 = scmp.eq.s32.totalorder %s21, 1
      %p102 = por %p100, %p101
      %p103 = scmp.ne.s32.totalorder %s95, %s98
      %p104 = scmp.eq.s32.totalorder %s21, 0
      %p105 = por %p103, %p104
      %p106 = scmp.ne.s32.totalorder %s95, %s98
      %p107 = scmp.eq.s32.totalorder %s26, 1
      %p108 = por %p106, %p107
      %p109 = scmp.ne.s32.totalorder %s98, %s99
      %p110 = scmp.eq.s32.totalorder %s26, 0
      %p111 = por %p109, %p110
      %p112 = scmp.ne.s32.totalorder %s98, %s99
      %p113 = scmp.eq.s32.totalorder %s27, 1
      %p114 = por %p112, %p113
      %p116 = scmp.ne.s32.totalorder %s99, %s115
      %p117 = scmp.eq.s32.totalorder %s27, 0
      %p118 = por %p116, %p117
      %s119 = ssub.s32 %s29, %s36
      %p120 = scmp.eq.s32.totalorder %s119, 0
      %s122 = sadd.s32 %s121, 1
      %s123 = scalar_select %p120, %s121, %s122
      %p126 = pneg %p120
      %p127 = scmp.eq.s32.totalorder %s21, 1
      %p128 = por %p126, %p127
      %p129 = scmp.ne.s32.totalorder %s121, %s124
      %p130 = scmp.eq.s32.totalorder %s21, 0
      %p131 = por %p129, %p130
      %p132 = scmp.ne.s32.totalorder %s121, %s124
      %p133 = scmp.eq.s32.totalorder %s26, 1
      %p134 = por %p132, %p133
      %p135 = scmp.ne.s32.totalorder %s124, %s125
      %p136 = scmp.eq.s32.totalorder %s26, 0
      %p137 = por %p135, %p136
      %p138 = scmp.ne.s32.totalorder %s124, %s125
      %p139 = scmp.eq.s32.totalorder %s27, 1
      %p140 = por %p138, %p139
      %p142 = scmp.ne.s32.totalorder %s125, %s141
      %p143 = scmp.eq.s32.totalorder %s27, 0
      %p144 = por %p142, %p143
      %s146 = sadd.s32 %s145, 1
      %p149 = scmp.eq.s32.totalorder %s21, 1
      %p150 = scmp.ne.s32.totalorder %s145, %s147
      %p151 = scmp.eq.s32.totalorder %s21, 0
      %p152 = por %p150, %p151
      %p153 = scmp.ne.s32.totalorder %s145, %s147
      %p154 = scmp.eq.s32.totalorder %s26, 1
      %p155 = por %p153, %p154
      %p156 = scmp.ne.s32.totalorder %s147, %s148
      %p157 = scmp.eq.s32.totalorder %s26, 0
      %p158 = por %p156, %p157
      %p159 = scmp.ne.s32.totalorder %s147, %s148
      %p160 = scmp.eq.s32.totalorder %s27, 1
      %p161 = por %p159, %p160
      %p163 = scmp.ne.s32.totalorder %s148, %s162
      %p164 = scmp.eq.s32.totalorder %s27, 0
      %p165 = por %p163, %p164
      %s166 = ssub.s32 %s28, %s40
      %p167 = scmp.eq.s32.totalorder %s166, 0
      %s169 = sadd.s32 %s168, 1
      %s170 = scalar_select %p167, %s168, %s169
      %p173 = pneg %p167
      %p174 = scmp.eq.s32.totalorder %s21, 1
      %p175 = por %p173, %p174
      %p176 = scmp.ne.s32.totalorder %s168, %s171
      %p177 = scmp.eq.s32.totalorder %s21, 0
      %p178 = por %p176, %p177
      %p179 = scmp.ne.s32.totalorder %s168, %s171
      %p180 = scmp.eq.s32.totalorder %s26, 1
      %p181 = por %p179, %p180
      %p182 = scmp.ne.s32.totalorder %s171, %s172
      %p183 = scmp.eq.s32.totalorder %s26, 0
      %p184 = por %p182, %p183
      %p185 = scmp.ne.s32.totalorder %s171, %s172
      %p186 = scmp.eq.s32.totalorder %s27, 1
      %p187 = por %p185, %p186
      %p189 = scmp.ne.s32.totalorder %s172, %s188
      %p190 = scmp.eq.s32.totalorder %s27, 0
      %p191 = por %p189, %p190
      %p192 = scmp.le.s32.totalorder 1, %s21
      %p193 = scmp.lt.s32.totalorder %s21, 3
      %p194 = pnand %p192, %p193
      %p195 = pneg %p194
      // Predicated region
      $region9: #{tpu_custom_call.1} parent=5 // pred_check
        _
      $region10: #{tpu_custom_call.1} parent=5 // pred_check_branch
        %197 = sbr.rel (%p194) target = $region12
      $region11: #{tpu_custom_call.1} parent=5 // pred_region
        %s198 = ssub.s32 %s21, 1
        // Predicated region
        $region13: #{tpu_custom_call.1} parent=11 // pred_check
          %p199 = pneg %p137
        $region14: #{tpu_custom_call.1} parent=11 // pred_check_branch
          %201 = sbr.rel (%p199) target = $region16
        $region15: #{tpu_custom_call.1} parent=11 // pred_region
          %p202 = scmp.lt.s32.totalorder %s31, 0
          %s203 = scalar_select %p202, %s31, 0
          %s204 = smul.addr %s203, 16
          %s205 = smul.addr %s204, 8
          %s206 = scalar_lea.vmem %s4, %s205
        $region16: #{tpu_custom_call.1} parent=11 // pred_fallthru
          _
        // Predicated region
        $region17: #{tpu_custom_call.1} parent=11 // pred_check
          %p207 = pneg %p158
        $region18: #{tpu_custom_call.1} parent=11 // pred_check_branch
          %209 = sbr.rel (%p207) target = $region20
        $region19: #{tpu_custom_call.1} parent=11 // pred_region
          _
        $region20: #{tpu_custom_call.1} parent=11 // pred_fallthru
          _
      $region12: #{tpu_custom_call.1} parent=5 // pred_fallthru
        _
      %p210 = scmp.lt.s32.totalorder %s21, 2
      // Predicated region
      $region21: #{tpu_custom_call.1} parent=5 // pred_check
        %p211 = pneg %p210
      $region22: #{tpu_custom_call.1} parent=5 // pred_check_branch
        %213 = sbr.rel (%p211) target = $region24
      $region23: #{tpu_custom_call.1} parent=5 // pred_region
        // Predicated region
        $region25: #{tpu_custom_call.1} parent=23 // pred_check
          %p214 = pneg %p53
        $region26: #{tpu_custom_call.1} parent=23 // pred_check_branch
          %216 = sbr.rel (%p214) target = $region28
        $region27: #{tpu_custom_call.1} parent=23 // pred_region
          %p217 = scmp.lt.s32.totalorder %s28, 1
          %s218 = scalar_select %p217, %s28, 1
          %s219 = smul.addr %s218, 8
          %s220 = scalar_lea.vmem %s1, %s219
        $region28: #{tpu_custom_call.1} parent=23 // pred_fallthru
          _
        // Predicated region
        $region29: #{tpu_custom_call.1} parent=23 // pred_check
          %p221 = pneg %p79
        $region30: #{tpu_custom_call.1} parent=23 // pred_check_branch
          %223 = sbr.rel (%p221) target = $region32
        $region31: #{tpu_custom_call.1} parent=23 // pred_region
          %p224 = scmp.lt.s32.totalorder %s28, 1
          %s225 = scalar_select %p224, %s28, 1
          %s226 = smul.addr %s225, 8
          %s227 = scalar_lea.vmem %s2, %s226
        $region32: #{tpu_custom_call.1} parent=23 // pred_fallthru
          _
        // Predicated region
        $region33: #{tpu_custom_call.1} parent=23 // pred_check
          %p228 = pneg %p105
        $region34: #{tpu_custom_call.1} parent=23 // pred_check_branch
          %230 = sbr.rel (%p228) target = $region36
        $region35: #{tpu_custom_call.1} parent=23 // pred_region
          %p231 = scmp.lt.s32.totalorder %s28, 1
          %s232 = scalar_select %p231, %s28, 1
          %s233 = smul.addr %s232, 8
          %s234 = scalar_lea.vmem %s3, %s233
        $region36: #{tpu_custom_call.1} parent=23 // pred_fallthru
          _
      $region24: #{tpu_custom_call.1} parent=5 // pred_fallthru
        _
      %p235 = scmp.le.s32.totalorder 1, %s21
      %p236 = scmp.lt.s32.totalorder %s21, 3
      %p237 = pnand %p235, %p236
      %p238 = pneg %p237
      // Predicated region
      $region37: #{tpu_custom_call.1} parent=5 // pred_check
        _
      $region38: #{tpu_custom_call.1} parent=5 // pred_check_branch
        %240 = sbr.rel (%p237) target = $region40
      $region39: #{tpu_custom_call.1} parent=5 // pred_region
        %s241 = ssub.s32 %s21, 1
        %p242 = scmp.lt.s32.totalorder %s30, 1
        %s243 = scalar_select %p242, %s30, 1
        %s244 = smul.addr %s243, 8
        %s245 = scalar_lea.vmem %s1, %s244
        %p246 = pneg %p59
        %p247 = pneg %p56
        %p248 = scmp.lt.s32.totalorder %s30, 1
        %s249 = scalar_select %p248, %s30, 1
        %s250 = smul.addr %s249, 8
        %s251 = scalar_lea.vmem %s2, %s250
        %p252 = pneg %p85
        %p253 = pneg %p82
        %p254 = scmp.lt.s32.totalorder %s30, 1
        %s255 = scalar_select %p254, %s30, 1
        %s256 = smul.addr %s255, 8
        %s257 = scalar_lea.vmem %s3, %s256
        %p258 = pneg %p111
        %p259 = pneg %p108
        %p260 = scmp.lt.s32.totalorder %s31, 0
        %s261 = scalar_select %p260, %s31, 0
        %s262 = smul.addr %s261, 16
        %s263 = smul.addr %s262, 8
        %s264 = scalar_lea.vmem %s4, %s263
        %p265 = pneg %p137
        %p266 = pneg %p134
        %p267 = pneg %p158
        %p268 = pneg %p155
        %p269 = pneg %p184
        %p270 = pneg %p181
        %s271 = sand.u32 %s171, 1
        %s272 = scalar_lea.sflag [#allocation6], %s271
        %s273 = sand.u32 %s171, 1
        %s274 = smul.addr %s273, 8
        %s275 = scalar_lea.vmem [#allocation5], %s274
        %p276 = scmp.lt.s32.totalorder %s30, 1
        %s277 = scalar_select %p276, %s30, 1
        %s278 = smul.addr %s277, 8
        %s279 = scalar_lea.vmem %s1, %s278
        %p280 = scmp.lt.s32.totalorder %s30, 1
        %s281 = scalar_select %p280, %s30, 1
        %s282 = smul.addr %s281, 8
        %s283 = scalar_lea.vmem %s2, %s282
        %p284 = scmp.lt.s32.totalorder %s30, 1
        %s285 = scalar_select %p284, %s30, 1
        %s286 = smul.addr %s285, 8
        %s287 = scalar_lea.vmem %s3, %s286
        %p288 = scmp.lt.s32.totalorder %s31, 0
        %s289 = scalar_select %p288, %s31, 0
        %s290 = smul.addr %s289, 16
        %s291 = smul.addr %s290, 8
        %s292 = scalar_lea.vmem %s4, %s291
        %p294 = scmp.eq.s32.totalorder %s31, 0
        // Predicated region
        $region41: #{tpu_custom_call.1} parent=39 // pred_check
          %p295 = pneg %p294
        $region42: #{tpu_custom_call.1} parent=39 // pred_check_branch
          %297 = sbr.rel (%p295) target = $region44
        $region43: #{tpu_custom_call.1} parent=39 // pred_region
          %298 = vst [vmem:[#allocation2] sm:$0xff] 0.0
        $region44: #{tpu_custom_call.1} parent=39 // pred_fallthru
          _
        %s299 = smul.u32 %s30, 8
        %s300 = sld [smem:[#allocation4 + %s299]]
        %s301 = sadd.s32 %s299, 8
        %s302 = sld [smem:[#allocation4 + %s301]]
        %s303 = smul.u32 %s31, 128
        %p304 = scmp.gt.s32.totalorder %s302, %s303
        %s305 = sadd.s32 %s303, 128
        %p306 = scmp.lt.s32.totalorder %s300, %s305
        %p307 = pnand %p304, %p306
        %p308 = pneg %p307
        // Predicated region
        $region45: #{tpu_custom_call.1} parent=39 // pred_check
          _
        $region46: #{tpu_custom_call.1} parent=39 // pred_check_branch
          %310 = sbr.rel (%p307) target = $region48
        $region47: #{tpu_custom_call.1} parent=39 // pred_region
          %v311 = vld [vmem:[%s292] sm:$0xff]
          %v312 = vld [vmem:[%s292 + $0x8] sm:$0xff]
          %v313 = vld [vmem:[%s292 + $0x10] sm:$0xff]
          %v314 = vld [vmem:[%s292 + $0x18] sm:$0xff]
          %v315 = vld [vmem:[%s292 + $0x20] sm:$0xff]
          %v316 = vld [vmem:[%s292 + $0x28] sm:$0xff]
          %v317 = vld [vmem:[%s292 + $0x30] sm:$0xff]
          %v318 = vld [vmem:[%s292 + $0x38] sm:$0xff]
          %v319 = vld [vmem:[%s292 + $0x40] sm:$0xff]
          %v320 = vld [vmem:[%s292 + $0x48] sm:$0xff]
          %v321 = vld [vmem:[%s292 + $0x50] sm:$0xff]
          %v322 = vld [vmem:[%s292 + $0x58] sm:$0xff]
          %v323 = vld [vmem:[%s292 + $0x60] sm:$0xff]
          %v324 = vld [vmem:[%s292 + $0x68] sm:$0xff]
          %v325 = vld [vmem:[%s292 + $0x70] sm:$0xff]
          %v326 = vld [vmem:[%s292 + $0x78] sm:$0xff]
          %v327 = vld [vmem:[%s279] sm:$0xff]
          %v328 = vld [vmem:[%s283] sm:$0xff]
          %v329 = vlaneseq
          %v330 = vand.u32 %v329, 127
          %v331 = vstv %s303
          %v332 = vadd.s32 %v330, %v331
          %333 = vset.pattern.permute.xlu0 0
          %334 = vperm.xlu0 %333, %v327
          %v335 = vpop.permute.xlu0 %334
          %vm336 = vcmp.ge.s32.totalorder %v332, %v335
          %337 = vset.pattern.permute.xlu0 0
          %338 = vperm.xlu0 %337, %v328
          %v339 = vpop.permute.xlu0 %338
          %vm340 = vcmp.lt.s32.totalorder %v332, %v339
          %vm341 = vmand %vm336, %vm340
          %v342 = vsel %vm341, 1, 0
          %v343 = vcvt.s32.f32 %v342
          %v344 = vpack.c.bf16 %v343, %v343
          %345 = vset.pattern.permute.xlu0 0
          %346 = vperm.xlu0 %345, %v311
          %v347 = vpop.permute.xlu0 %346
          %348 = vset.pattern.permute.xlu0 0
          %349 = vperm.xlu0 %348, %v312
          %v350 = vpop.permute.xlu0 %349
          %351 = vset.pattern.permute.xlu0 0
          %352 = vperm.xlu0 %351, %v313
          %v353 = vpop.permute.xlu0 %352
          %354 = vset.pattern.permute.xlu0 0
          %355 = vperm.xlu0 %354, %v314
          %v356 = vpop.permute.xlu0 %355
          %357 = vset.pattern.permute.xlu0 0
          %358 = vperm.xlu0 %357, %v315
          %v359 = vpop.permute.xlu0 %358
          %360 = vset.pattern.permute.xlu0 0
          %361 = vperm.xlu0 %360, %v316
          %v362 = vpop.permute.xlu0 %361
          %363 = vset.pattern.permute.xlu0 0
          %364 = vperm.xlu0 %363, %v317
          %v365 = vpop.permute.xlu0 %364
          %366 = vset.pattern.permute.xlu0 0
          %367 = vperm.xlu0 %366, %v318
          %v368 = vpop.permute.xlu0 %367
          %369 = vset.pattern.permute.xlu0 0
          %370 = vperm.xlu0 %369, %v319
          %v371 = vpop.permute.xlu0 %370
          %372 = vset.pattern.permute.xlu0 0
          %373 = vperm.xlu0 %372, %v320
          %v374 = vpop.permute.xlu0 %373
          %375 = vset.pattern.permute.xlu0 0
          %376 = vperm.xlu0 %375, %v321
          %v377 = vpop.permute.xlu0 %376
          %378 = vset.pattern.permute.xlu0 0
          %379 = vperm.xlu0 %378, %v322
          %v380 = vpop.permute.xlu0 %379
          %381 = vset.pattern.permute.xlu0 0
          %382 = vperm.xlu0 %381, %v323
          %v383 = vpop.permute.xlu0 %382
          %384 = vset.pattern.permute.xlu0 0
          %385 = vperm.xlu0 %384, %v324
          %v386 = vpop.permute.xlu0 %385
          %387 = vset.pattern.permute.xlu0 0
          %388 = vperm.xlu0 %387, %v325
          %v389 = vpop.permute.xlu0 %388
          %390 = vset.pattern.permute.xlu0 0
          %391 = vperm.xlu0 %390, %v326
          %v392 = vpop.permute.xlu0 %391
          %vm393 = vcmp.eq.s32.totalorder %v330, %v347
          %vm394 = vcmp.eq.s32.totalorder %v330, %v350
          %vm395 = vcmp.eq.s32.totalorder %v330, %v353
          %vm396 = vcmp.eq.s32.totalorder %v330, %v356
          %vm397 = vcmp.eq.s32.totalorder %v330, %v359
          %vm398 = vcmp.eq.s32.totalorder %v330, %v362
          %vm399 = vcmp.eq.s32.totalorder %v330, %v365
          %vm400 = vcmp.eq.s32.totalorder %v330, %v368
          %vm401 = vcmp.eq.s32.totalorder %v330, %v371
          %vm402 = vcmp.eq.s32.totalorder %v330, %v374
          %vm403 = vcmp.eq.s32.totalorder %v330, %v377
          %vm404 = vcmp.eq.s32.totalorder %v330, %v380
          %vm405 = vcmp.eq.s32.totalorder %v330, %v383
          %vm406 = vcmp.eq.s32.totalorder %v330, %v386
          %vm407 = vcmp.eq.s32.totalorder %v330, %v389
          %vm408 = vcmp.eq.s32.totalorder %v330, %v392
          %v409 = vsel %vm393, 1, 0
          %v410 = vsel %vm394, 1, 0
          %v411 = vsel %vm395, 1, 0
          %v412 = vsel %vm396, 1, 0
          %v413 = vsel %vm397, 1, 0
          %v414 = vsel %vm398, 1, 0
          %v415 = vsel %vm399, 1, 0
          %v416 = vsel %vm400, 1, 0
          %v417 = vsel %vm401, 1, 0
          %v418 = vsel %vm402, 1, 0
          %v419 = vsel %vm403, 1, 0
          %v420 = vsel %vm404, 1, 0
          %v421 = vsel %vm405, 1, 0
          %v422 = vsel %vm406, 1, 0
          %v423 = vsel %vm407, 1, 0
          %v424 = vsel %vm408, 1, 0
          %v425 = vcvt.s32.f32 %v409
          %v426 = vcvt.s32.f32 %v410
          %v427 = vcvt.s32.f32 %v411
          %v428 = vcvt.s32.f32 %v412
          %v429 = vcvt.s32.f32 %v413
          %v430 = vcvt.s32.f32 %v414
          %v431 = vcvt.s32.f32 %v415
          %v432 = vcvt.s32.f32 %v416
          %v433 = vcvt.s32.f32 %v417
          %v434 = vcvt.s32.f32 %v418
          %v435 = vcvt.s32.f32 %v419
          %v436 = vcvt.s32.f32 %v420
          %v437 = vcvt.s32.f32 %v421
          %v438 = vcvt.s32.f32 %v422
          %v439 = vcvt.s32.f32 %v423
          %v440 = vcvt.s32.f32 %v424
          %v441 = vpack.c.bf16 %v426, %v425
          %v442 = vpack.c.bf16 %v428, %v427
          %v443 = vpack.c.bf16 %v430, %v429
          %v444 = vpack.c.bf16 %v432, %v431
          %v445 = vpack.c.bf16 %v434, %v433
          %v446 = vpack.c.bf16 %v436, %v435
          %v447 = vpack.c.bf16 %v438, %v437
          %v448 = vpack.c.bf16 %v440, %v439
          %v449 = vld [vmem:[#allocation2] sm:$0xff]
          %450 = vmatprep.subr.bf16.mxu0 0
          %451 = vmatpush1.bf16.msra.mxu0 %v441
          %452 = vmatprep.subr.bf16.mxu0 0
          %453 = vmatpush1.bf16.msra.mxu0 %v442
          %454 = vmatprep.subr.bf16.mxu0 0
          %455 = vmatpush1.bf16.msra.mxu0 %v443
          %456 = vmatprep.subr.bf16.mxu0 0
          %457 = vmatpush1.bf16.msra.mxu0 %v444
          %458 = vmatprep.subr.bf16.mxu0 0
          %459 = vmatpush1.bf16.msra.mxu0 %v445
          %460 = vmatprep.subr.bf16.mxu0 0
          %461 = vmatpush1.bf16.msra.mxu0 %v446
          %462 = vmatprep.subr.bf16.mxu0 0
          %463 = vmatpush1.bf16.msra.mxu0 %v447
          %464 = vmatprep.subr.bf16.mxu0 0
          %465 = vmatpush1.bf16.msra.mxu0 %v448
          %466 = vmatprep.subr.bf16.mxu0 0
          %467 = vmatpush1.bf16.msra.mxu0 0
          %468 = vmatprep.subr.bf16.mxu0 0
          %469 = vmatpush1.bf16.msra.mxu0 0
          %470 = vmatprep.subr.bf16.mxu0 0
          %471 = vmatpush1.bf16.msra.mxu0 0
          %472 = vmatprep.subr.bf16.mxu0 0
          %473 = vmatpush1.bf16.msra.mxu0 0
          %474 = vmatprep.subr.bf16.mxu0 0
          %475 = vmatpush1.bf16.msra.mxu0 0
          %476 = vmatprep.subr.bf16.mxu0 0
          %477 = vmatpush1.bf16.msra.mxu0 0
          %478 = vmatprep.subr.bf16.mxu0 0
          %479 = vmatpush1.bf16.msra.mxu0 0
          %480 = vmatprep.subr.bf16.mxu0 0
          %481 = vmatpush1.bf16.msra.mxu0 0
          %482 = vmatprep.mubr.bf16.mxu0 0
          %483 = vmatmul.mubr.bf16.gmra.mrb[0].mxu0 %v344
          %v484 = vpop.f32.mrb[0].mxu0
          %v485 = vadd.f32 0.0, %v484
          %v486 = vpop.f32.mrb[0].mxu0
          %v487 = vpop.f32.mrb[0].mxu0
          %v488 = vpop.f32.mrb[0].mxu0
          %489 = vdwg.mxu0
          %v490 = vadd.f32 %v449, %v485
          %491 = vst [vmem:[#allocation2] sm:$0xff] %v490
        $region48: #{tpu_custom_call.1} parent=39 // pred_fallthru
          _
        // Predicated region
        $region49: #{tpu_custom_call.1} parent=39 // pred_check
          %p492 = pneg %p294
        $region50: #{tpu_custom_call.1} parent=39 // pred_check_branch
          %494 = sbr.rel (%p492) target = $region52
        $region51: #{tpu_custom_call.1} parent=39 // pred_region
          %v495 = vld [vmem:[#allocation2] sm:$0xff]
          %v496 = vld [vmem:[%s5] sm:$0xff]
          %v497 = vld [vmem:[%s5 + $0x8] sm:$0xff]
          %v498 = vld [vmem:[%s5 + $0x10] sm:$0xff]
          %v499 = vld [vmem:[%s5 + $0x18] sm:$0xff]
          %v500 = vld [vmem:[%s5 + $0x20] sm:$0xff]
          %v501 = vld [vmem:[%s5 + $0x28] sm:$0xff]
          %v502 = vld [vmem:[%s5 + $0x30] sm:$0xff]
          %v503 = vld [vmem:[%s5 + $0x38] sm:$0xff]
          %v504 = vld [vmem:[%s5 + $0x40] sm:$0xff]
          %v505 = vld [vmem:[%s5 + $0x48] sm:$0xff]
          %v506 = vld [vmem:[%s5 + $0x50] sm:$0xff]
          %v507 = vld [vmem:[%s5 + $0x58] sm:$0xff]
          %v508 = vld [vmem:[%s5 + $0x60] sm:$0xff]
          %v509 = vld [vmem:[%s5 + $0x68] sm:$0xff]
          %v510 = vld [vmem:[%s5 + $0x70] sm:$0xff]
          %v511 = vld [vmem:[%s5 + $0x78] sm:$0xff]
          %512 = vmatprep.subr.mxu0 0.0
          %513 = vmatpush1.msra.mxu0 %v496
          %514 = vmatprep.subr.mxu0 0.0
          %515 = vmatpush1.msra.mxu0 %v497
          %516 = vmatprep.subr.mxu0 0.0
          %517 = vmatpush1.msra.mxu0 %v498
          %518 = vmatprep.subr.mxu0 0.0
          %519 = vmatpush1.msra.mxu0 %v499
          %520 = vmatprep.subr.mxu0 0.0
          %521 = vmatpush1.msra.mxu0 %v500
          %522 = vmatprep.subr.mxu0 0.0
          %523 = vmatpush1.msra.mxu0 %v501
          %524 = vmatprep.subr.mxu0 0.0
          %525 = vmatpush1.msra.mxu0 %v502
          %526 = vmatprep.subr.mxu0 0.0
          %527 = vmatpush1.msra.mxu0 %v503
          %528 = vmatprep.subr.mxu0 0.0
          %529 = vmatpush1.msra.mxu0 %v504
          %530 = vmatprep.subr.mxu0 0.0
          %531 = vmatpush1.msra.mxu0 %v505
          %532 = vmatprep.subr.mxu0 0.0
          %533 = vmatpush1.msra.mxu0 %v506
          %534 = vmatprep.subr.mxu0 0.0
          %535 = vmatpush1.msra.mxu0 %v507
          %536 = vmatprep.subr.mxu0 0.0
          %537 = vmatpush1.msra.mxu0 %v508
          %538 = vmatprep.subr.mxu0 0.0
          %539 = vmatpush1.msra.mxu0 %v509
          %540 = vmatprep.subr.mxu0 0.0
          %541 = vmatpush1.msra.mxu0 %v510
          %542 = vmatprep.subr.mxu0 0.0
          %543 = vmatpush1.msra.mxu0 %v511
          %544 = vmatprep.subr.mxu0 0.0
          %545 = vmatpush1.msra.mxu0 0.0
          %546 = vmatprep.subr.mxu0 0.0
          %547 = vmatpush1.msra.mxu0 0.0
          %548 = vmatprep.subr.mxu0 0.0
          %549 = vmatpush1.msra.mxu0 0.0
          %550 = vmatprep.subr.mxu0 0.0
          %551 = vmatpush1.msra.mxu0 0.0
          %552 = vmatprep.subr.mxu0 0.0
          %553 = vmatpush1.msra.mxu0 0.0
          %554 = vmatprep.subr.mxu0 0.0
          %555 = vmatpush1.msra.mxu0 0.0
          %556 = vmatprep.subr.mxu0 0.0
          %557 = vmatpush1.msra.mxu0 0.0
          %558 = vmatprep.subr.mxu0 0.0
          %559 = vmatpush1.msra.mxu0 0.0
          %560 = vmatprep.subr.mxu0 0.0
          %561 = vmatpush1.msra.mxu0 0.0
          %562 = vmatprep.subr.mxu0 0.0
          %563 = vmatpush1.msra.mxu0 0.0
          %564 = vmatprep.subr.mxu0 0.0
          %565 = vmatpush1.msra.mxu0 0.0
          %566 = vmatprep.subr.mxu0 0.0
          %567 = vmatpush1.msra.mxu0 0.0
          %568 = vmatprep.subr.mxu0 0.0
          %569 = vmatpush1.msra.mxu0 0.0
          %570 = vmatprep.subr.mxu0 0.0
          %571 = vmatpush1.msra.mxu0 0.0
          %572 = vmatprep.subr.mxu0 0.0
          %573 = vmatpush1.msra.mxu0 0.0
          %574 = vmatprep.subr.mxu0 0.0
          %575 = vmatpush1.msra.mxu0 0.0
          %576 = vmatprep.mubr.f32.mxu0 0.0
          %577 = vmatmul.mubr.f32.gmra.mrb[0].mxu0 %v495
          %v578 = vpop.f32.mrb[0].mxu0
          %v579 = vadd.f32 0.0, %v578
          %v580 = vpop.f32.mrb[0].mxu0
          %581 = vdwg.mxu0
          %v582 = vld [vmem:[%s287] sm:$0xff]
          %584 = vset.pattern.permute.xlu0 0
          %585 = vperm.xlu0 %584, %v582
          %v586 = vpop.permute.xlu0 %585
          %v588 = vmul.f32 %v579, %v586
          %589 = vst [vmem:[%s275] sm:$0xff] %v588
        $region52: #{tpu_custom_call.1} parent=39 // pred_fallthru
          _
        %s590 = sand.u32 %s171, 1
        %s591 = scalar_lea.sflag [#allocation6], %s590
        %s592 = sand.u32 %s171, 1
        %s593 = smul.addr %s592, 8
        %s594 = scalar_lea.vmem [#allocation5], %s593
        // Predicated region
        $region53: #{tpu_custom_call.1} parent=39 // pred_check
          %p595 = pneg %p181
        $region54: #{tpu_custom_call.1} parent=39 // pred_check_branch
          %597 = sbr.rel (%p595) target = $region56
        $region55: #{tpu_custom_call.1} parent=39 // pred_region
          %s599 = ssub.s32 128, 128
          %600 = vsyncadd %s591, %s599
          %s601 = smul.addr %s30, 128
          %s602 = scalar_lea.hbm %s6, %s601
          %s604 = sshll.u32 %s594, 4
          %s605 = int_to_ptr.vmem [resolvable:$true] %s604
          %607 = dma.vmem_to_hbm [thread:$0]  %s605, 128, %s602, %s591
        $region56: #{tpu_custom_call.1} parent=39 // pred_fallthru
          _
      $region40: #{tpu_custom_call.1} parent=5 // pred_fallthru
        _
      %p608 = scmp.le.s32.totalorder 2, %s21
      // Predicated region
      $region57: #{tpu_custom_call.1} parent=5 // pred_check
        %p609 = pneg %p608
      $region58: #{tpu_custom_call.1} parent=5 // pred_check_branch
        %611 = sbr.rel (%p609) target = $region60
      $region59: #{tpu_custom_call.1} parent=5 // pred_region
        %s612 = ssub.s32 %s21, 2
        // Predicated region
        $region61: #{tpu_custom_call.1} parent=59 // pred_check
          %p613 = pneg %p187
        $region62: #{tpu_custom_call.1} parent=59 // pred_check_branch
          %615 = sbr.rel (%p613) target = $region64
        $region63: #{tpu_custom_call.1} parent=59 // pred_region
          %s616 = sand.u32 %s172, 1
          %s617 = scalar_lea.sflag [#allocation6], %s616
          %s618 = sand.u32 %s172, 1
          %s619 = smul.addr %s618, 8
          %s620 = scalar_lea.vmem [#allocation5], %s619
          %621 = dma.done %s617, 128
        $region64: #{tpu_custom_call.1} parent=59 // pred_fallthru
          _
      $region60: #{tpu_custom_call.1} parent=5 // pred_fallthru
        _
    $region6: #{tpu_custom_call.1} parent=1 // loop_footer
      %s25 = sadd.s32 1, %s21
    $region7: #{tpu_custom_call.1} parent=1 // loop_footer_branch
      %20 = sbr.rel target = $region3
    $region8: #{tpu_custom_call.1} parent=1 // loop_exit
      _
    %622 = vsyncpa [#allocation6], 1
    %s623 = scalar_lea.sflag [#allocation6], 1
    %624 = vsyncpa %s623, 1

</llo_original>
